<compile_context>
chip_gen: v6e
topology: v6e:2x2x1
jax: 0.10.0
libtpu: 0.0.40
codegen_flags: <defaults>
</compile_context>

<pallas_src>
import functools

import jax
import jax.numpy as jnp
import numpy as np
from jax.experimental import pallas as pl
from jax.experimental.pallas import tpu as pltpu

LANE = 128     # lane (last-dim) tile
SUBLANE = 8    # sublane (second-last-dim) tile

# Match PyTorch semantics: nn.GELU() default is the exact (erf) form,
# nn.SiLU() is x*sigmoid(x).
ACTIVATIONS = {
    "relu": lambda x: jnp.maximum(x, 0.0),
    "tanh": jnp.tanh,
    "gelu": lambda x: jax.nn.gelu(x, approximate=False),
    "swish": lambda x: x * jax.nn.sigmoid(x),
}


def _round_up(v, m):
    return (v + m - 1) // m * m


def _pick_tile(dim, preferred=512):
    """Largest MXU-friendly tile <= preferred that divides dim (dim % 128 == 0)."""
    for t in (preferred, 256, 128):
        if dim % t == 0:
            return min(t, dim)
    return dim


# --------------------------- fused (resident) kernel -------------------------
def _fused_mlp_kernel(*refs, n_layers, act_fn):
    # refs = (x_ref, w0_ref, b0_ref, w1_ref, b1_ref, ..., o_ref)
    # x_ref: [TM, In0p] (f32), wi_ref: [Inip, Outip] (bf16), bi_ref: [1, Outip] (f32)
    x_ref = refs[0]
    o_ref = refs[-1]
    h = x_ref[...].astype(jnp.float32)
    for i in range(n_layers):
        w_ref = refs[1 + 2 * i]
        b_ref = refs[2 + 2 * i]
        # bf16 MXU matmul with f32 accumulation.
        h = jnp.dot(h.astype(w_ref.dtype), w_ref[...],
                    preferred_element_type=jnp.float32)
        h = h + b_ref[...]                      # bias-add / activation in f32
        if i < n_layers - 1:                    # no activation after final Linear
            h = act_fn(h)
    o_ref[...] = h.astype(o_ref.dtype)


# ----------------- per-layer K-tiled fallback (capacity guard) ---------------
def _linear_kernel(x_ref, w_ref, b_ref, o_ref, acc_ref, *, act_fn, apply_act):
    k = pl.program_id(2)

    @pl.when(k == 0)
    def _():
        acc_ref[...] = jnp.zeros_like(acc_ref)

    acc_ref[...] += jnp.dot(x_ref[...].astype(w_ref.dtype), w_ref[...],
                            preferred_element_type=jnp.float32)

    @pl.when(k == pl.num_programs(2) - 1)
    def _():
        h = acc_ref[...] + b_ref[...]
        if apply_act:
            h = act_fn(h)
        o_ref[...] = h.astype(o_ref.dtype)


def _linear_layer(h, w, b, *, act_fn, apply_act, tm, out_dtype):
    Mp, Kp = h.shape
    _, Np = w.shape
    tk = _pick_tile(Kp)
    tn = _pick_tile(Np)
    grid = (Mp // tm, Np // tn, Kp // tk)
    kernel = functools.partial(_linear_kernel, act_fn=act_fn, apply_act=apply_act)
    return pl.pallas_call(
        kernel,
        out_shape=jax.ShapeDtypeStruct((Mp, Np), out_dtype),
        grid=grid,
        in_specs=[
            pl.BlockSpec((tm, tk), lambda i, j, k: (i, k)),
            pl.BlockSpec((tk, tn), lambda i, j, k: (k, j)),
            pl.BlockSpec((1, tn), lambda i, j, k: (0, j)),
        ],
        out_specs=pl.BlockSpec((tm, tn), lambda i, j, k: (i, j)),
        scratch_shapes=[pltpu.VMEM((tm, tn), jnp.float32)],
        compiler_params=pltpu.CompilerParams(
            dimension_semantics=("parallel", "parallel", "arbitrary")),
        cost_estimate=pl.CostEstimate(
            flops=2 * Mp * Kp * Np,
            transcendentals=(Mp * Np if apply_act else 0),
            bytes_accessed=h.size * h.dtype.itemsize
            + w.size * w.dtype.itemsize + b.size * b.dtype.itemsize
            + Mp * Np * jnp.dtype(out_dtype).itemsize),
    )(h, w, b)


# ----------------------------------- forward ---------------------------------
def _mlp_forward_impl(x, padded_params, *, activation, out_dim,
                      force_layerwise=False):
    """padded_params: tuple of (w [in_pad, out_pad] bf16, b [1, out_pad] f32)."""
    batch, in_dim = x.shape
    n_layers = len(padded_params)
    act_fn = ACTIVATIONS[activation]
    in_pad = padded_params[0][0].shape[0]
    out_pad = padded_params[-1][0].shape[1]

    # Batch tile: sublane-aligned for tiny batches, MXU-row-height friendly
    # (multiple of 256) for large ones.
    if batch >= 512:
        tm = 512
    elif batch >= 256:
        tm = 256
    else:
        tm = _round_up(max(batch, 1), SUBLANE)
    batch_pad = _round_up(max(batch, 1), tm)

    x32 = x.astype(jnp.float32)
    if batch_pad != batch or in_pad != in_dim:
        x_pad = jnp.pad(x32, ((0, batch_pad - batch), (0, in_pad - in_dim)))
    else:
        x_pad = x32

    # --- VMEM footprint of the weights-resident strategy (trace-time static) ---
    param_bytes = sum(w.size * w.dtype.itemsize + b.size * b.dtype.itemsize
                      for w, b in padded_params)
    max_feat = max([in_pad] + [w.shape[1] for w, _ in padded_params])
    io_tile_bytes = 4 * tm * (in_pad + out_pad)       # f32 x/out tiles
    work_bytes = 2 * 4 * tm * max_feat                # in-flight activations
    fused_need = param_bytes + 2 * io_tile_bytes + work_bytes
    use_fused = (not force_layerwise) and fused_need < (48 << 20)

    if use_fused:
        flat_params = []
        in_specs = [pl.BlockSpec((tm, in_pad), lambda i: (i, 0))]
        for w, b in padded_params:
            flat_params += [w, b]
            # Constant index_map -> DMA'd once, resident across the grid.
            in_specs.append(pl.BlockSpec(w.shape, lambda i: (0, 0)))
            in_specs.append(pl.BlockSpec(b.shape, lambda i: (0, 0)))

        flops = sum(2 * batch_pad * w.shape[0] * w.shape[1]
                    for w, _ in padded_params)
        transcendentals = 0
        if activation in ("tanh", "gelu", "swish"):
            transcendentals = sum(batch_pad * w.shape[1]
                                  for w, _ in padded_params[:-1])
        bytes_accessed = (x_pad.size * 4 + param_bytes + batch_pad * out_pad * 4)

        vmem_limit = int(min(64 << 20,
                             max(16 << 20, fused_need * 5 // 4 + (2 << 20))))

        kernel = functools.partial(_fused_mlp_kernel, n_layers=n_layers,
                                   act_fn=act_fn)
        y_pad = pl.pallas_call(
            kernel,
            out_shape=jax.ShapeDtypeStruct((batch_pad, out_pad), jnp.float32),
            grid=(batch_pad // tm,),
            in_specs=in_specs,
            out_specs=pl.BlockSpec((tm, out_pad), lambda i: (i, 0)),
            compiler_params=pltpu.CompilerParams(
                dimension_semantics=("parallel",),   # megacore split on v7x
                vmem_limit_bytes=vmem_limit),
            cost_estimate=pl.CostEstimate(
                flops=flops, transcendentals=transcendentals,
                bytes_accessed=bytes_accessed),
        )(x_pad, *flat_params)
    else:
        # Capacity-guard fallback: per-layer (M, N, K)-tiled matmul.
        h = x_pad
        for i, (w, b) in enumerate(padded_params):
            apply_act = i < n_layers - 1
            out_dtype = w.dtype if apply_act else jnp.float32
            h = _linear_layer(h, w, b, act_fn=act_fn, apply_act=apply_act,
                              tm=tm, out_dtype=out_dtype)
        y_pad = h

    return y_pad[:batch, :out_dim]


mlp_forward = jax.jit(
    _mlp_forward_impl,
    static_argnames=("activation", "out_dim", "force_layerwise"))


# ------------------------------ parameter init --------------------------------
def orthogonal_init(key, rows, cols, gain):
    """Mimics torch.nn.init.orthogonal_ (QR of a Gaussian, sign-fixed)."""
    flat = (max(rows, cols), min(rows, cols))
    a = jax.random.normal(key, flat, dtype=jnp.float32)
    q, r = jnp.linalg.qr(a)
    q = q * jnp.sign(jnp.diag(r))[None, :]
    if rows < cols:
        q = q.T
    return (gain * q[:rows, :cols]).astype(jnp.float32)


def make_mlp_params(key, in_dim, hidden_list, out_dim,
                    std=float(np.sqrt(2)), bias_const=0.0):
    """Raw PyTorch-layout params: list of (w [out, in], b [out])."""
    dims = [in_dim] + list(hidden_list) + [out_dim]
    params = []
    n_layers = len(dims) - 1
    for i in range(n_layers):
        key, sub = jax.random.split(key)
        d_in, d_out = dims[i], dims[i + 1]
        if i < n_layers - 1:
            gain, bconst = float(np.sqrt(2)), 0.0   # hidden: std=sqrt(2), bias=0
        else:
            gain, bconst = std, bias_const          # final: user std / bias_const
        w = orthogonal_init(sub, d_out, d_in, gain)  # PyTorch layout [out, in]
        b = jnp.full((d_out,), bconst, dtype=jnp.float32)
        params.append((w, b))
    return params


def prepare_padded_params(params, weight_dtype=jnp.bfloat16):
    """Pre-transpose to [in, out], zero-pad feature dims to multiples of 128.

    Weights are stored in bf16 (MXU-native on v6e/v7x, halves DMA/VMEM);
    biases stay f32 so the bias-add/activation runs fully in f32.
    """
    padded = []
    for w, b in params:
        d_out, d_in = w.shape
        in_pad = _round_up(d_in, LANE)
        out_pad = _round_up(d_out, LANE)
        w_t = jnp.zeros((in_pad, out_pad), jnp.float32)
        w_t = w_t.at[:d_in, :d_out].set(w.T).astype(weight_dtype)
        b2 = jnp.zeros((1, out_pad), jnp.float32)
        b2 = b2.at[0, :d_out].set(b)
        padded.append((w_t, b2))
    return tuple(padded)


# ------------------------------------ main ------------------------------------
if __name__ == "__main__":
    key = jax.random.PRNGKey(0)

    in_dim, hidden_list, out_dim = 16, [32, 32], 8
    batch = 2
    activation = "tanh"

    pkey, xkey = jax.random.split(key)
    raw_params = make_mlp_params(pkey, in_dim, hidden_list, out_dim)
    padded_params = prepare_padded_params(raw_params)   # bf16 weights, f32 bias
    x = jax.random.normal(xkey, (batch, in_dim), dtype=jnp.float32)

    # plain-JAX f32 reference on the unpadded params
    ref = x
    for i, (w, b) in enumerate(raw_params):
        ref = ref @ w.T + b
        if i < len(raw_params) - 1:
            ref = jnp.tanh(ref)

    # Fused, weights-resident path (default for small/medium MLPs).
    y = mlp_forward(x, padded_params, activation=activation, out_dim=out_dim)
    y = jax.block_until_ready(y)
    assert y.shape == (batch, out_dim)
    np.testing.assert_allclose(np.asarray(y), np.asarray(ref),
                               rtol=2e-2, atol=2e-2)   # bf16-weight tolerance

    # Per-layer K-tiled fallback (capacity guard), forced here for coverage.
    y2 = mlp_forward(x, padded_params, activation=activation, out_dim=out_dim,
                     force_layerwise=True)
    y2 = jax.block_until_ready(y2)
    np.testing.assert_allclose(np.asarray(y2), np.asarray(ref),
                               rtol=2e-2, atol=2e-2)

    print("KERNEL_OK")
</pallas_src>

<mosaic_0001>
module attributes {stable_mosaic.version = 11 : i64} {
  func.func @_fused_mlp_kernel(%arg0: i32, %arg1: memref<8x128xf32, #tpu.memory_space<vmem>>, %arg2: memref<128x128xbf16, #tpu.memory_space<vmem>>, %arg3: memref<1x128xf32, #tpu.memory_space<vmem>>, %arg4: memref<128x128xbf16, #tpu.memory_space<vmem>>, %arg5: memref<1x128xf32, #tpu.memory_space<vmem>>, %arg6: memref<128x128xbf16, #tpu.memory_space<vmem>>, %arg7: memref<1x128xf32, #tpu.memory_space<vmem>>, %arg8: memref<8x128xf32, #tpu.memory_space<vmem>>) attributes {dimension_semantics = [#tpu.dimension_semantics<parallel>], iteration_bounds = array<i64: 1>, scalar_prefetch = 0 : i64, scratch_operands = 0 : i64, tpu.core_type = #tpu.core_type<tc>, window_params = [{transform_indices = @transform_0, window_bounds = array<i64: 8, 128>}, {pipeline_mode = #tpu.pipeline_mode<synchronous>, transform_indices = @transform_1, window_bounds = array<i64: 128, 128>}, {pipeline_mode = #tpu.pipeline_mode<synchronous>, transform_indices = @transform_2, window_bounds = array<i64: 1, 128>}, {pipeline_mode = #tpu.pipeline_mode<synchronous>, transform_indices = @transform_3, window_bounds = array<i64: 128, 128>}, {pipeline_mode = #tpu.pipeline_mode<synchronous>, transform_indices = @transform_4, window_bounds = array<i64: 1, 128>}, {pipeline_mode = #tpu.pipeline_mode<synchronous>, transform_indices = @transform_5, window_bounds = array<i64: 128, 128>}, {pipeline_mode = #tpu.pipeline_mode<synchronous>, transform_indices = @transform_6, window_bounds = array<i64: 1, 128>}, {transform_indices = @transform_7, window_bounds = array<i64: 8, 128>}]} {
    %c0 = arith.constant 0 : index
    %c0_0 = arith.constant 0 : index
    %0 = vector.load %arg1[%c0, %c0_0] : memref<8x128xf32, #tpu.memory_space<vmem>>, vector<8x128xf32>
    %1 = arith.truncf %0 : vector<8x128xf32> to vector<8x128xbf16>
    %c0_1 = arith.constant 0 : index
    %c0_2 = arith.constant 0 : index
    %2 = vector.load %arg2[%c0_1, %c0_2] : memref<128x128xbf16, #tpu.memory_space<vmem>>, vector<128x128xbf16>
    %cst = arith.constant dense<0.000000e+00> : vector<8x128xf32>
    %3 = tpu.matmul %1, %2, %cst {dimension_numbers = #tpu.dot_dimension_numbers<[1], [0], [0], [1], [0, 0, 1, 1], [], []>} : vector<8x128xbf16>, vector<128x128xbf16>, vector<8x128xf32> -> vector<8x128xf32>
    %c0_3 = arith.constant 0 : index
    %c0_4 = arith.constant 0 : index
    %4 = vector.load %arg3[%c0_3, %c0_4] : memref<1x128xf32, #tpu.memory_space<vmem>>, vector<1x128xf32>
    %5 = vector.broadcast %4 : vector<1x128xf32> to vector<8x128xf32>
    %6 = arith.addf %3, %5 : vector<8x128xf32>
    %7 = math.tanh %6 : vector<8x128xf32>
    %8 = arith.truncf %7 : vector<8x128xf32> to vector<8x128xbf16>
    %c0_5 = arith.constant 0 : index
    %c0_6 = arith.constant 0 : index
    %9 = vector.load %arg4[%c0_5, %c0_6] : memref<128x128xbf16, #tpu.memory_space<vmem>>, vector<128x128xbf16>
    %cst_7 = arith.constant dense<0.000000e+00> : vector<8x128xf32>
    %10 = tpu.matmul %8, %9, %cst_7 {dimension_numbers = #tpu.dot_dimension_numbers<[1], [0], [0], [1], [0, 0, 1, 1], [], []>} : vector<8x128xbf16>, vector<128x128xbf16>, vector<8x128xf32> -> vector<8x128xf32>
    %c0_8 = arith.constant 0 : index
    %c0_9 = arith.constant 0 : index
    %11 = vector.load %arg5[%c0_8, %c0_9] : memref<1x128xf32, #tpu.memory_space<vmem>>, vector<1x128xf32>
    %12 = vector.broadcast %11 : vector<1x128xf32> to vector<8x128xf32>
    %13 = arith.addf %10, %12 : vector<8x128xf32>
    %14 = math.tanh %13 : vector<8x128xf32>
    %15 = arith.truncf %14 : vector<8x128xf32> to vector<8x128xbf16>
    %c0_10 = arith.constant 0 : index
    %c0_11 = arith.constant 0 : index
    %16 = vector.load %arg6[%c0_10, %c0_11] : memref<128x128xbf16, #tpu.memory_space<vmem>>, vector<128x128xbf16>
    %cst_12 = arith.constant dense<0.000000e+00> : vector<8x128xf32>
    %17 = tpu.matmul %15, %16, %cst_12 {dimension_numbers = #tpu.dot_dimension_numbers<[1], [0], [0], [1], [0, 0, 1, 1], [], []>} : vector<8x128xbf16>, vector<128x128xbf16>, vector<8x128xf32> -> vector<8x128xf32>
    %c0_13 = arith.constant 0 : index
    %c0_14 = arith.constant 0 : index
    %18 = vector.load %arg7[%c0_13, %c0_14] : memref<1x128xf32, #tpu.memory_space<vmem>>, vector<1x128xf32>
    %19 = vector.broadcast %18 : vector<1x128xf32> to vector<8x128xf32>
    %20 = arith.addf %17, %19 : vector<8x128xf32>
    %c0_15 = arith.constant 0 : index
    %c0_16 = arith.constant 0 : index
    %21 = vector.load %arg8[%c0_15, %c0_16] : memref<8x128xf32, #tpu.memory_space<vmem>>, vector<8x128xf32>
    tpu.vector_store %arg8[%c0_15, %c0_16], %20 {strides = array<i32>} : memref<8x128xf32, #tpu.memory_space<vmem>>, vector<8x128xf32>,
    return
  }
  func.func @transform_0(%arg0: i32) -> (i32, i32) {
    %c0_i32 = arith.constant 0 : i32
    %c0_i32_0 = arith.constant 0 : i32
    return %arg0, %c0_i32 : i32, i32
  }
  func.func @transform_1(%arg0: i32) -> (i32, i32) {
    %c0_i32 = arith.constant 0 : i32
    %c0_i32_0 = arith.constant 0 : i32
    %c0_i32_1 = arith.constant 0 : i32
    return %c0_i32, %c0_i32_0 : i32, i32
  }
  func.func @transform_2(%arg0: i32) -> (i32, i32) {
    %c0_i32 = arith.constant 0 : i32
    %c0_i32_0 = arith.constant 0 : i32
    %c0_i32_1 = arith.constant 0 : i32
    return %c0_i32, %c0_i32_0 : i32, i32
  }
  func.func @transform_3(%arg0: i32) -> (i32, i32) {
    %c0_i32 = arith.constant 0 : i32
    %c0_i32_0 = arith.constant 0 : i32
    %c0_i32_1 = arith.constant 0 : i32
    return %c0_i32, %c0_i32_0 : i32, i32
  }
  func.func @transform_4(%arg0: i32) -> (i32, i32) {
    %c0_i32 = arith.constant 0 : i32
    %c0_i32_0 = arith.constant 0 : i32
    %c0_i32_1 = arith.constant 0 : i32
    return %c0_i32, %c0_i32_0 : i32, i32
  }
  func.func @transform_5(%arg0: i32) -> (i32, i32) {
    %c0_i32 = arith.constant 0 : i32
    %c0_i32_0 = arith.constant 0 : i32
    %c0_i32_1 = arith.constant 0 : i32
    return %c0_i32, %c0_i32_0 : i32, i32
  }
  func.func @transform_6(%arg0: i32) -> (i32, i32) {
    %c0_i32 = arith.constant 0 : i32
    %c0_i32_0 = arith.constant 0 : i32
    %c0_i32_1 = arith.constant 0 : i32
    return %c0_i32, %c0_i32_0 : i32, i32
  }
  func.func @transform_7(%arg0: i32) -> (i32, i32) {
    %c0_i32 = arith.constant 0 : i32
    %c0_i32_0 = arith.constant 0 : i32
    return %arg0, %c0_i32 : i32, i32
  }
}

</mosaic_0001>

<llo_original>
// kernel: _mlp_forward_impl.1
$region0: #{_mlp_forward_impl.1}
  #allocation0 [shape = 'u32[]', space=smem, size = 0x4, offset = 0x4, fixed_abs, tag = 'smem constant byte address 0x4 - core index']
  #allocation1 [shape = 'u32[144,128]{1,0:T(1,128)}', space=vmem, size = 0x12000, scoped, tag = 'internal scratch']
  %s0 = inlined_call_operand.vmem [shape: f32[8,128], index: 0, kind: input, shape index: {}]
  %s1 = inlined_call_operand.hbm [shape: bf16[128,128], index: 1, kind: input, shape index: {}]
  %s2 = inlined_call_operand.vmem [shape: f32[1,128], index: 2, kind: input, shape index: {}]
  %s3 = inlined_call_operand.hbm [shape: bf16[128,128], index: 3, kind: input, shape index: {}]
  %s4 = inlined_call_operand.vmem [shape: f32[1,128], index: 4, kind: input, shape index: {}]
  %s5 = inlined_call_operand.hbm [shape: bf16[128,128], index: 5, kind: input, shape index: {}]
  %s6 = inlined_call_operand.vmem [shape: f32[1,128], index: 6, kind: input, shape index: {}]
  %s7 = inlined_call_operand.vmem [shape: f32[8,128], index: 7, kind: output, shape index: {}]
  %s8 = sld [smem:[#allocation0]]
  $region50: #{_mlp_forward_impl.1} parent=0
    _
  %s10 = ssub.s32 1, %s8
  %s11 = scalar_select 0, %s10, %s8
  $region1: #{_mlp_forward_impl.1} parent=0
    #allocation2 [shape = 'u8[32768]{0}', space=vmem, size = 0x8000, scoped, tag = 'input window, operand 1, single buffered']
    #allocation3 [shape = 's32[1]{0}', space=sflag, size = 0x4, scoped, tag = 'scoped memory for _mlp_forward_impl.1']
    #allocation4 [shape = 'u8[32768]{0}', space=vmem, size = 0x8000, scoped, tag = 'input window, operand 3, single buffered']
    #allocation5 [shape = 's32[1]{0}', space=sflag, size = 0x4, scoped, tag = 'scoped memory for _mlp_forward_impl.1']
    #allocation6 [shape = 'u8[32768]{0}', space=vmem, size = 0x8000, scoped, tag = 'input window, operand 5, single buffered']
    %12 = vsyncpa [#allocation3], 0
    %13 = vsyncpa [#allocation5], 0
    // Predicated region
    $region2: #{_mlp_forward_impl.1} parent=1 // pred_check
      _
    $region3: #{_mlp_forward_impl.1} parent=1 // pred_check_branch
      %15 = sbr.rel (0) target = $region5
    $region4: #{_mlp_forward_impl.1} parent=1 // pred_region
      _
    $region5: #{_mlp_forward_impl.1} parent=1 // pred_fallthru
      _
    // Predicated region
    $region6: #{_mlp_forward_impl.1} parent=1 // pred_check
      _
    $region7: #{_mlp_forward_impl.1} parent=1 // pred_check_branch
      %17 = sbr.rel (0) target = $region9
    $region8: #{_mlp_forward_impl.1} parent=1 // pred_region
      %s19 = ssub.s32 1024, 1024
      %20 = vsyncadd [#allocation3], %s19
      %s21 = sshll.u32 [#allocation2], 4
      %s22 = int_to_ptr.vmem [resolvable:$true] %s21
      %27 = dma.hbm_to_vmem [thread:$0]  %s1, 1024, %s22, [#allocation3], 64, 64, 4
    $region9: #{_mlp_forward_impl.1} parent=1 // pred_fallthru
      _
    // Predicated region
    $region10: #{_mlp_forward_impl.1} parent=1 // pred_check
      _
    $region11: #{_mlp_forward_impl.1} parent=1 // pred_check_branch
      %29 = sbr.rel (0) target = $region13
    $region12: #{_mlp_forward_impl.1} parent=1 // pred_region
      _
    $region13: #{_mlp_forward_impl.1} parent=1 // pred_fallthru
      _
    // Predicated region
    $region14: #{_mlp_forward_impl.1} parent=1 // pred_check
      _
    $region15: #{_mlp_forward_impl.1} parent=1 // pred_check_branch
      %31 = sbr.rel (0) target = $region17
    $region16: #{_mlp_forward_impl.1} parent=1 // pred_region
      %s33 = ssub.s32 1024, 1024
      %34 = vsyncadd [#allocation5], %s33
      %s35 = sshll.u32 [#allocation4], 4
      %s36 = int_to_ptr.vmem [resolvable:$true] %s35
      %41 = dma.hbm_to_vmem [thread:$0]  %s3, 1024, %s36, [#allocation5], 64, 64, 4
    $region17: #{_mlp_forward_impl.1} parent=1 // pred_fallthru
      _
    // Predicated region
    $region18: #{_mlp_forward_impl.1} parent=1 // pred_check
      _
    $region19: #{_mlp_forward_impl.1} parent=1 // pred_check_branch
      %43 = sbr.rel (0) target = $region21
    $region20: #{_mlp_forward_impl.1} parent=1 // pred_region
      _
    $region21: #{_mlp_forward_impl.1} parent=1 // pred_fallthru
      _
    // Predicated region
    $region22: #{_mlp_forward_impl.1} parent=1 // pred_check
      _
    $region23: #{_mlp_forward_impl.1} parent=1 // pred_check_branch
      %45 = sbr.rel (0) target = $region25
    $region24: #{_mlp_forward_impl.1} parent=1 // pred_region
      %s47 = ssub.s32 1024, 1024
      %48 = vsyncadd [#allocation5], %s47
      %s49 = sshll.u32 [#allocation6], 4
      %s50 = int_to_ptr.vmem [resolvable:$true] %s49
      %55 = dma.hbm_to_vmem [thread:$0]  %s5, 1024, %s50, [#allocation5], 64, 64, 4
    $region25: #{_mlp_forward_impl.1} parent=1 // pred_fallthru
      _
    // Predicated region
    $region26: #{_mlp_forward_impl.1} parent=1 // pred_check
      _
    $region27: #{_mlp_forward_impl.1} parent=1 // pred_check_branch
      %57 = sbr.rel (0) target = $region29
    $region28: #{_mlp_forward_impl.1} parent=1 // pred_region
      _
    $region29: #{_mlp_forward_impl.1} parent=1 // pred_fallthru
      _
    // Predicated region
    $region30: #{_mlp_forward_impl.1} parent=1 // pred_check
      _
    $region31: #{_mlp_forward_impl.1} parent=1 // pred_check_branch
      %59 = sbr.rel (0) target = $region33
    $region32: #{_mlp_forward_impl.1} parent=1 // pred_region
      %60 = dma.done [#allocation3], 1024
    $region33: #{_mlp_forward_impl.1} parent=1 // pred_fallthru
      _
    // Predicated region
    $region34: #{_mlp_forward_impl.1} parent=1 // pred_check
      _
    $region35: #{_mlp_forward_impl.1} parent=1 // pred_check_branch
      %62 = sbr.rel (0) target = $region37
    $region36: #{_mlp_forward_impl.1} parent=1 // pred_region
      %63 = dma.done [#allocation5], 1024
    $region37: #{_mlp_forward_impl.1} parent=1 // pred_fallthru
      _
    // Predicated region
    $region38: #{_mlp_forward_impl.1} parent=1 // pred_check
      _
    $region39: #{_mlp_forward_impl.1} parent=1 // pred_check_branch
      %65 = sbr.rel (0) target = $region41
    $region40: #{_mlp_forward_impl.1} parent=1 // pred_region
      %66 = dma.done [#allocation5], 1024
    $region41: #{_mlp_forward_impl.1} parent=1 // pred_fallthru
      _
    %v68 = vld [vmem:[%s0] sm:$0xff]
    %v69 = vpack.c.bf16 %v68, %v68
    %v70 = vld [vmem:[#allocation2] sm:$0xf]
    %v71 = vld [vmem:[#allocation2 + $0x4] sm:$0xf]
    %v72 = vld [vmem:[#allocation2 + $0x8] sm:$0xf]
    %v73 = vld [vmem:[#allocation2 + $0xc] sm:$0xf]
    %v74 = vld [vmem:[#allocation2 + $0x10] sm:$0xf]
    %v75 = vld [vmem:[#allocation2 + $0x14] sm:$0xf]
    %v76 = vld [vmem:[#allocation2 + $0x18] sm:$0xf]
    %v77 = vld [vmem:[#allocation2 + $0x1c] sm:$0xf]
    %v78 = vld [vmem:[#allocation2 + $0x20] sm:$0xf]
    %v79 = vld [vmem:[#allocation2 + $0x24] sm:$0xf]
    %v80 = vld [vmem:[#allocation2 + $0x28] sm:$0xf]
    %v81 = vld [vmem:[#allocation2 + $0x2c] sm:$0xf]
    %v82 = vld [vmem:[#allocation2 + $0x30] sm:$0xf]
    %v83 = vld [vmem:[#allocation2 + $0x34] sm:$0xf]
    %v84 = vld [vmem:[#allocation2 + $0x38] sm:$0xf]
    %v85 = vld [vmem:[#allocation2 + $0x3c] sm:$0xf]
    %v86 = vld [vmem:[%s2] sm:$0x1]
    %v88 = vlaneseq
    %v89 = vshrl.u32 %v88, 7
    %v90 = vsub.s32 0, %v89
    %v91 = vrot.slane %v86, %v90
    %v109 = vunpack.c.l.b16 %v70
    %v110 = vunpack.c.l.b16 %v71
    %v111 = vunpack.c.l.b16 %v72
    %v112 = vunpack.c.l.b16 %v73
    %v113 = vunpack.c.l.b16 %v74
    %v114 = vunpack.c.l.b16 %v75
    %v115 = vunpack.c.l.b16 %v76
    %v116 = vunpack.c.l.b16 %v77
    %v117 = vunpack.c.l.b16 %v78
    %v118 = vunpack.c.l.b16 %v79
    %v119 = vunpack.c.l.b16 %v80
    %v120 = vunpack.c.l.b16 %v81
    %v121 = vunpack.c.l.b16 %v82
    %v122 = vunpack.c.l.b16 %v83
    %v123 = vunpack.c.l.b16 %v84
    %v124 = vunpack.c.l.b16 %v85
    %v125 = vpack.c.b16 %v110, %v109
    %v126 = vpack.c.b16 %v112, %v111
    %v127 = vpack.c.b16 %v114, %v113
    %v128 = vpack.c.b16 %v116, %v115
    %v129 = vpack.c.b16 %v118, %v117
    %v130 = vpack.c.b16 %v120, %v119
    %v131 = vpack.c.b16 %v122, %v121
    %v132 = vpack.c.b16 %v124, %v123
    %141 = vmatprep.subr.bf16.mxu0 0
    %142 = vmatpush1.bf16.msra.mxu0 %v132
    %143 = vmatprep.subr.bf16.mxu0 0
    %144 = vmatpush1.bf16.msra.mxu0 %v131
    %145 = vmatprep.subr.bf16.mxu0 0
    %146 = vmatpush1.bf16.msra.mxu0 %v130
    %147 = vmatprep.subr.bf16.mxu0 0
    %148 = vmatpush1.bf16.msra.mxu0 %v129
    %149 = vmatprep.subr.bf16.mxu0 0
    %150 = vmatpush1.bf16.msra.mxu0 %v128
    %151 = vmatprep.subr.bf16.mxu0 0
    %152 = vmatpush1.bf16.msra.mxu0 %v127
    %153 = vmatprep.subr.bf16.mxu0 0
    %154 = vmatpush1.bf16.msra.mxu0 %v126
    %155 = vmatprep.subr.bf16.mxu0 0
    %156 = vmatpush1.bf16.msra.mxu0 %v125
    %157 = vmatprep.subr.bf16.mxu0 0
    %158 = vmatpush2.bf16.msra.mxu0 0
    %159 = vmatprep.subr.bf16.mxu0 0
    %160 = vmatpush2.bf16.msra.mxu0 0
    %161 = vmatprep.subr.bf16.mxu0 0
    %162 = vmatpush2.bf16.msra.mxu0 0
    %163 = vmatprep.subr.bf16.mxu0 0
    %164 = vmatpush2.bf16.msra.mxu0 0
    %165 = vmatprep.subr.bf16.mxu0 0
    %166 = vmatpush2.bf16.msra.mxu0 0
    %167 = vmatprep.subr.bf16.mxu0 0
    %168 = vmatpush2.bf16.msra.mxu0 0
    %169 = vmatprep.subr.bf16.mxu0 0
    %170 = vmatpush2.bf16.msra.mxu0 0
    %171 = vmatprep.subr.bf16.mxu0 0
    %172 = vmatpush2.bf16.msra.mxu0 0
    %173 = vmatprep.mubr.bf16.mxu0 0
    %174 = vmatmul.mubr.bf16.gmra.mxu0 %v69
    %v175 = vpop.f32.mrf.mxu0
    %v176 = vadd.f32 %v91, %v175
    %v177 = vpop.f32.mrf.mxu0
    %v178 = vpop.f32.mrf.mxu0
    %v179 = vpop.f32.mrf.mxu0
    %180 = vdwg.mxu0
    %v181 = vtanh.pop %v176
    %v182 = vpack.c.bf16 %v181, %v181
    %v183 = vld [vmem:[#allocation4] sm:$0xf]
    %v184 = vld [vmem:[#allocation4 + $0x4] sm:$0xf]
    %v185 = vld [vmem:[#allocation4 + $0x8] sm:$0xf]
    %v186 = vld [vmem:[#allocation4 + $0xc] sm:$0xf]
    %v187 = vld [vmem:[#allocation4 + $0x10] sm:$0xf]
    %v188 = vld [vmem:[#allocation4 + $0x14] sm:$0xf]
    %v189 = vld [vmem:[#allocation4 + $0x18] sm:$0xf]
    %v190 = vld [vmem:[#allocation4 + $0x1c] sm:$0xf]
    %v191 = vld [vmem:[#allocation4 + $0x20] sm:$0xf]
    %v192 = vld [vmem:[#allocation4 + $0x24] sm:$0xf]
    %v193 = vld [vmem:[#allocation4 + $0x28] sm:$0xf]
    %v194 = vld [vmem:[#allocation4 + $0x2c] sm:$0xf]
    %v195 = vld [vmem:[#allocation4 + $0x30] sm:$0xf]
    %v196 = vld [vmem:[#allocation4 + $0x34] sm:$0xf]
    %v197 = vld [vmem:[#allocation4 + $0x38] sm:$0xf]
    %v198 = vld [vmem:[#allocation4 + $0x3c] sm:$0xf]
    %v199 = vld [vmem:[%s4] sm:$0x1]
    %v201 = vlaneseq
    %v202 = vshrl.u32 %v201, 7
    %v203 = vsub.s32 0, %v202
    %v204 = vrot.slane %v199, %v203
    %v222 = vunpack.c.l.b16 %v183
    %v223 = vunpack.c.l.b16 %v184
    %v224 = vunpack.c.l.b16 %v185
    %v225 = vunpack.c.l.b16 %v186
    %v226 = vunpack.c.l.b16 %v187
    %v227 = vunpack.c.l.b16 %v188
    %v228 = vunpack.c.l.b16 %v189
    %v229 = vunpack.c.l.b16 %v190
    %v230 = vunpack.c.l.b16 %v191
    %v231 = vunpack.c.l.b16 %v192
    %v232 = vunpack.c.l.b16 %v193
    %v233 = vunpack.c.l.b16 %v194
    %v234 = vunpack.c.l.b16 %v195
    %v235 = vunpack.c.l.b16 %v196
    %v236 = vunpack.c.l.b16 %v197
    %v237 = vunpack.c.l.b16 %v198
    %v238 = vpack.c.b16 %v223, %v222
    %v239 = vpack.c.b16 %v225, %v224
    %v240 = vpack.c.b16 %v227, %v226
    %v241 = vpack.c.b16 %v229, %v228
    %v242 = vpack.c.b16 %v231, %v230
    %v243 = vpack.c.b16 %v233, %v232
    %v244 = vpack.c.b16 %v235, %v234
    %v245 = vpack.c.b16 %v237, %v236
    %254 = vmatprep.subr.bf16.mxu0 0
    %255 = vmatpush1.bf16.msra.mxu0 %v245
    %256 = vmatprep.subr.bf16.mxu0 0
    %257 = vmatpush1.bf16.msra.mxu0 %v244
    %258 = vmatprep.subr.bf16.mxu0 0
    %259 = vmatpush1.bf16.msra.mxu0 %v243
    %260 = vmatprep.subr.bf16.mxu0 0
    %261 = vmatpush1.bf16.msra.mxu0 %v242
    %262 = vmatprep.subr.bf16.mxu0 0
    %263 = vmatpush1.bf16.msra.mxu0 %v241
    %264 = vmatprep.subr.bf16.mxu0 0
    %265 = vmatpush1.bf16.msra.mxu0 %v240
    %266 = vmatprep.subr.bf16.mxu0 0
    %267 = vmatpush1.bf16.msra.mxu0 %v239
    %268 = vmatprep.subr.bf16.mxu0 0
    %269 = vmatpush1.bf16.msra.mxu0 %v238
    %270 = vmatprep.subr.bf16.mxu0 0
    %271 = vmatpush2.bf16.msra.mxu0 0
    %272 = vmatprep.subr.bf16.mxu0 0
    %273 = vmatpush2.bf16.msra.mxu0 0
    %274 = vmatprep.subr.bf16.mxu0 0
    %275 = vmatpush2.bf16.msra.mxu0 0
    %276 = vmatprep.subr.bf16.mxu0 0
    %277 = vmatpush2.bf16.msra.mxu0 0
    %278 = vmatprep.subr.bf16.mxu0 0
    %279 = vmatpush2.bf16.msra.mxu0 0
    %280 = vmatprep.subr.bf16.mxu0 0
    %281 = vmatpush2.bf16.msra.mxu0 0
    %282 = vmatprep.subr.bf16.mxu0 0
    %283 = vmatpush2.bf16.msra.mxu0 0
    %284 = vmatprep.subr.bf16.mxu0 0
    %285 = vmatpush2.bf16.msra.mxu0 0
    %286 = vmatprep.mubr.bf16.mxu0 0
    %287 = vmatmul.mubr.bf16.gmra.mxu0 %v182
    %v288 = vpop.f32.mrf.mxu0
    %v289 = vadd.f32 %v204, %v288
    %v290 = vpop.f32.mrf.mxu0
    %v291 = vpop.f32.mrf.mxu0
    %v292 = vpop.f32.mrf.mxu0
    %293 = vdwg.mxu0
    %v294 = vtanh.pop %v289
    %v295 = vpack.c.bf16 %v294, %v294
    %v296 = vld [vmem:[#allocation6] sm:$0xf]
    %v297 = vld [vmem:[#allocation6 + $0x4] sm:$0xf]
    %v298 = vld [vmem:[#allocation6 + $0x8] sm:$0xf]
    %v299 = vld [vmem:[#allocation6 + $0xc] sm:$0xf]
    %v300 = vld [vmem:[#allocation6 + $0x10] sm:$0xf]
    %v301 = vld [vmem:[#allocation6 + $0x14] sm:$0xf]
    %v302 = vld [vmem:[#allocation6 + $0x18] sm:$0xf]
    %v303 = vld [vmem:[#allocation6 + $0x1c] sm:$0xf]
    %v304 = vld [vmem:[#allocation6 + $0x20] sm:$0xf]
    %v305 = vld [vmem:[#allocation6 + $0x24] sm:$0xf]
    %v306 = vld [vmem:[#allocation6 + $0x28] sm:$0xf]
    %v307 = vld [vmem:[#allocation6 + $0x2c] sm:$0xf]
    %v308 = vld [vmem:[#allocation6 + $0x30] sm:$0xf]
    %v309 = vld [vmem:[#allocation6 + $0x34] sm:$0xf]
    %v310 = vld [vmem:[#allocation6 + $0x38] sm:$0xf]
    %v311 = vld [vmem:[#allocation6 + $0x3c] sm:$0xf]
    %v312 = vld [vmem:[%s6] sm:$0x1]
    %v314 = vlaneseq
    %v315 = vshrl.u32 %v314, 7
    %v316 = vsub.s32 0, %v315
    %v317 = vrot.slane %v312, %v316
    %v335 = vunpack.c.l.b16 %v296
    %v336 = vunpack.c.l.b16 %v297
    %v337 = vunpack.c.l.b16 %v298
    %v338 = vunpack.c.l.b16 %v299
    %v339 = vunpack.c.l.b16 %v300
    %v340 = vunpack.c.l.b16 %v301
    %v341 = vunpack.c.l.b16 %v302
    %v342 = vunpack.c.l.b16 %v303
    %v343 = vunpack.c.l.b16 %v304
    %v344 = vunpack.c.l.b16 %v305
    %v345 = vunpack.c.l.b16 %v306
    %v346 = vunpack.c.l.b16 %v307
    %v347 = vunpack.c.l.b16 %v308
    %v348 = vunpack.c.l.b16 %v309
    %v349 = vunpack.c.l.b16 %v310
    %v350 = vunpack.c.l.b16 %v311
    %v351 = vpack.c.b16 %v336, %v335
    %v352 = vpack.c.b16 %v338, %v337
    %v353 = vpack.c.b16 %v340, %v339
    %v354 = vpack.c.b16 %v342, %v341
    %v355 = vpack.c.b16 %v344, %v343
    %v356 = vpack.c.b16 %v346, %v345
    %v357 = vpack.c.b16 %v348, %v347
    %v358 = vpack.c.b16 %v350, %v349
    %367 = vmatprep.subr.bf16.mxu0 0
    %368 = vmatpush1.bf16.msra.mxu0 %v358
    %369 = vmatprep.subr.bf16.mxu0 0
    %370 = vmatpush1.bf16.msra.mxu0 %v357
    %371 = vmatprep.subr.bf16.mxu0 0
    %372 = vmatpush1.bf16.msra.mxu0 %v356
    %373 = vmatprep.subr.bf16.mxu0 0
    %374 = vmatpush1.bf16.msra.mxu0 %v355
    %375 = vmatprep.subr.bf16.mxu0 0
    %376 = vmatpush1.bf16.msra.mxu0 %v354
    %377 = vmatprep.subr.bf16.mxu0 0
    %378 = vmatpush1.bf16.msra.mxu0 %v353
    %379 = vmatprep.subr.bf16.mxu0 0
    %380 = vmatpush1.bf16.msra.mxu0 %v352
    %381 = vmatprep.subr.bf16.mxu0 0
    %382 = vmatpush1.bf16.msra.mxu0 %v351
    %383 = vmatprep.subr.bf16.mxu0 0
    %384 = vmatpush2.bf16.msra.mxu0 0
    %385 = vmatprep.subr.bf16.mxu0 0
    %386 = vmatpush2.bf16.msra.mxu0 0
    %387 = vmatprep.subr.bf16.mxu0 0
    %388 = vmatpush2.bf16.msra.mxu0 0
    %389 = vmatprep.subr.bf16.mxu0 0
    %390 = vmatpush2.bf16.msra.mxu0 0
    %391 = vmatprep.subr.bf16.mxu0 0
    %392 = vmatpush2.bf16.msra.mxu0 0
    %393 = vmatprep.subr.bf16.mxu0 0
    %394 = vmatpush2.bf16.msra.mxu0 0
    %395 = vmatprep.subr.bf16.mxu0 0
    %396 = vmatpush2.bf16.msra.mxu0 0
    %397 = vmatprep.subr.bf16.mxu0 0
    %398 = vmatpush2.bf16.msra.mxu0 0
    %399 = vmatprep.mubr.bf16.mxu0 0
    %400 = vmatmul.mubr.bf16.gmra.mxu0 %v295
    %v401 = vpop.f32.mrf.mxu0
    %v402 = vadd.f32 %v317, %v401
    %v403 = vpop.f32.mrf.mxu0
    %v404 = vpop.f32.mrf.mxu0
    %v405 = vpop.f32.mrf.mxu0
    %406 = vdwg.mxu0
    %407 = vst [vmem:[%s7] sm:$0xff] %v402
    // Predicated region
    $region42: #{_mlp_forward_impl.1} parent=1 // pred_check
      _
    $region43: #{_mlp_forward_impl.1} parent=1 // pred_check_branch
      %409 = sbr.rel (0) target = $region45
    $region44: #{_mlp_forward_impl.1} parent=1 // pred_region
      _
    $region45: #{_mlp_forward_impl.1} parent=1 // pred_fallthru
      _
    // Predicated region
    $region46: #{_mlp_forward_impl.1} parent=1 // pred_check
      _
    $region47: #{_mlp_forward_impl.1} parent=1 // pred_check_branch
      %411 = sbr.rel (0) target = $region49
    $region48: #{_mlp_forward_impl.1} parent=1 // pred_region
      _
    $region49: #{_mlp_forward_impl.1} parent=1 // pred_fallthru
      _
    %412 = vsyncpa [#allocation3], 1
    %413 = vsyncpa [#allocation5], 1

</llo_original>
